<compile_context>
chip_gen: v7x
topology: tpu7x:2x2x1
jax: 0.10.0
libtpu: 0.0.40
codegen_flags: <defaults>
</compile_context>

<pallas_src>
import functools
import math

import jax
import jax.numpy as jnp
from jax import lax
from jax.experimental import pallas as pl
from jax.experimental.pallas import tpu as pltpu

LN_EPS = 1e-5  # torch.nn.LayerNorm default
_LANES = 128
_TARGET_BLOCK_BYTES = 4 * 1024 * 1024  # ~4 MiB I/O blocks hit >85% of HBM roofline


def _round_up(a: int, b: int) -> int:
    return (a + b - 1) // b * b


@functools.lru_cache(maxsize=1)
def _vmem_budget_bytes() -> int:
    """Generation-aware VMEM budget: half of physical VMEM, capped at 64 MiB.

    v5e/v6e (128 MiB physical) -> 64 MiB; v7x (64 MiB physical) -> 32 MiB.
    """
    try:
        phys = int(pltpu.get_tpu_info().vmem_capacity_bytes)
    except Exception:
        phys = 64 << 20  # conservative fallback
    return max(min(phys // 2, 64 << 20), 12 << 20)


# ----------------------------------------------------------------------------- kernels
def _addnorm_rowwise_kernel(x_ref, y_ref, p_ref, o_ref):
    """Plain path: one original row per kernel row (used when H % 128 == 0 or H is odd-sized)."""
    p = p_ref[...]                    # (8, H) f32 invariant: gate / weight / bias
    gate, w, b = p[0:1, :], p[1:2, :], p[2:3, :]

    x = x_ref[...].astype(jnp.float32)
    y = y_ref[...].astype(jnp.float32)
    z = x + y * gate

    mean = jnp.mean(z, axis=-1, keepdims=True)
    centered = z - mean
    var = jnp.mean(centered * centered, axis=-1, keepdims=True)
    o_ref[...] = (centered * lax.rsqrt(var + LN_EPS) * w + b).astype(o_ref.dtype)


def _addnorm_folded_kernel(x_ref, y_ref, p_ref, seg_ref, o_ref, *, inv_h):
    """Lane-dense path: g = 128 // H original rows folded into each kernel row.

    seg_ref is a (128, 128) bf16 0/1 block-diagonal matrix: (z @ seg)[r, j] is the
    sum of z over the H lanes of original row j // H, already broadcast to its lanes.
    """
    p = p_ref[...]                    # (8, 128) f32 invariant
    gate, w, b = p[0:1, :], p[1:2, :], p[2:3, :]
    seg = seg_ref[...]                # (128, 128) bf16, entries 0/1

    def seg_mean(v):
        # Split f32 into bf16 hi+lo: products with 0/1 are exact, MXU accumulates in
        # f32, so the segmented mean is accurate to ~1e-6 relative (passes 1e-5 atol).
        hi = v.astype(jnp.bfloat16)
        lo = (v - hi.astype(jnp.float32)).astype(jnp.bfloat16)
        s = jnp.dot(hi, seg, preferred_element_type=jnp.float32)
        s = s + jnp.dot(lo, seg, preferred_element_type=jnp.float32)
        return s * inv_h

    x = x_ref[...].astype(jnp.float32)
    y = y_ref[...].astype(jnp.float32)
    z = x + y * gate

    centered = z - seg_mean(z)
    var = seg_mean(centered * centered)
    o_ref[...] = (centered * lax.rsqrt(var + LN_EPS) * w + b).astype(o_ref.dtype)


# ----------------------------------------------------------------------------- wrapper
@functools.partial(jax.jit, static_argnames=("trainable_add",))
def add_norm(x, y, mask, ln_weight, ln_bias, *, trainable_add=True):
    """AddNorm forward. x, y: (..., H). mask / ln_weight / ln_bias: (H,)."""
    assert x.shape == y.shape
    orig_shape = x.shape
    H = orig_shape[-1]
    out_dtype = x.dtype
    rows = math.prod(orig_shape[:-1]) if len(orig_shape) > 1 else 1

    # Fold factor: pack g rows side-by-side across lanes when H divides 128.
    if H < _LANES and _LANES % H == 0:
        g = _LANES // H
    else:
        g = 1  # TODO(synk): H not dividing (or being a multiple of) 128 stays lane-padded.
    GH = g * H

    # Loop-invariant per-feature params, tiled to the folded lane width and stacked
    # into a single (8, GH) f32 block (one descriptor; block index never changes, so
    # the pipeline fetches it once).
    if trainable_add:
        gate = jax.nn.sigmoid(mask.astype(jnp.float32)) * 2.0
    else:
        gate = jnp.ones((H,), jnp.float32)  # exact x + y
    params = jnp.zeros((8, GH), jnp.float32)
    params = params.at[0].set(jnp.tile(gate, g))
    params = params.at[1].set(jnp.tile(ln_weight.astype(jnp.float32), g))
    params = params.at[2].set(jnp.tile(ln_bias.astype(jnp.float32), g))

    # ---- tile sizing: by bytes, with real VMEM accounting ----------------------------
    itemsize = jnp.dtype(out_dtype).itemsize
    pack = {4: 8, 2: 16, 1: 32}.get(itemsize, 8)      # sublane packing per dtype
    lanes = _round_up(GH, _LANES)                      # lane padding for VMEM accounting
    budget = _vmem_budget_bytes()
    # Per folded row: 6 double-buffered I/O blocks (x, y, out) in the I/O dtype plus
    # ~6 live f32 intermediates the fused LayerNorm materializes in compiler VMEM.
    per_row = lanes * (6 * itemsize + 6 * 4)

    rows_f = pl.cdiv(rows, g)
    rows_packed = _round_up(max(rows_f, 1), pack)
    tile = min((budget - (2 << 20)) // per_row,
               max(_TARGET_BLOCK_BYTES // (lanes * itemsize), pack),
               rows_packed)
    tile = max(pack, tile // pack * pack)

    num_tiles = pl.cdiv(rows_packed, tile)
    if num_tiles == 1 and rows_packed > pack:
        num_tiles = 2          # give both v7x TensorCores work
    if num_tiles > 1 and num_tiles % 2:
        num_tiles += 1         # even tile count -> balanced last wave on 2 TCs
    tile = _round_up(pl.cdiv(rows_packed, num_tiles), pack)
    padded_rows_f = num_tiles * tile

    # ---- pad once, fold, run ---------------------------------------------------------
    x2 = x.reshape(rows, H)
    y2 = y.reshape(rows, H)
    pad = padded_rows_f * g - rows
    if pad:
        # Padded rows are zero; they form whole segments, give finite LayerNorm output
        # and are sliced off below.
        x2 = jnp.pad(x2, ((0, pad), (0, 0)))
        y2 = jnp.pad(y2, ((0, pad), (0, 0)))
    x2 = x2.reshape(padded_rows_f, GH)
    y2 = y2.reshape(padded_rows_f, GH)

    io_spec = pl.BlockSpec((tile, GH), lambda i: (i, 0))
    p_spec = pl.BlockSpec((8, GH), lambda i: (0, 0))

    if g > 1:
        lane_seg = jnp.arange(GH) // H
        seg = (lane_seg[:, None] == lane_seg[None, :]).astype(jnp.bfloat16)  # (128, 128)
        kernel = functools.partial(_addnorm_folded_kernel, inv_h=1.0 / H)
        in_specs = [io_spec, io_spec, p_spec, pl.BlockSpec((GH, GH), lambda i: (0, 0))]
        operands = (x2, y2, params, seg)
    else:
        kernel = _addnorm_rowwise_kernel
        in_specs = [io_spec, io_spec, p_spec]
        operands = (x2, y2, params)

    # NOTE: if profiles show inter-step DMA gaps on v7x, pipeline_mode=pl.Buffered(3)
    # on the x/y/out specs is the next knob (VMEM accounting above leaves headroom).
    out2 = pl.pallas_call(
        kernel,
        out_shape=jax.ShapeDtypeStruct((padded_rows_f, GH), out_dtype),
        grid_spec=pltpu.PrefetchScalarGridSpec(
            num_scalar_prefetch=0,
            grid=(num_tiles,),
            in_specs=in_specs,
            out_specs=io_spec,
        ),
        compiler_params=pltpu.CompilerParams(
            dimension_semantics=("parallel",),
            vmem_limit_bytes=int(budget),
        ),
    )(*operands)

    out2 = out2.reshape(padded_rows_f * g, H)
    if pad:
        out2 = out2[:rows]
    return out2.reshape(orig_shape)


# ----------------------------------------------------------------------------- reference
def _reference(x, y, mask, w, b, trainable_add=True):
    xf = x.astype(jnp.float32)
    yf = y.astype(jnp.float32)
    if trainable_add:
        z = xf + yf * jax.nn.sigmoid(mask.astype(jnp.float32)) * 2.0
    else:
        z = xf + yf
    mean = jnp.mean(z, axis=-1, keepdims=True)
    var = jnp.mean((z - mean) ** 2, axis=-1, keepdims=True)
    out = (z - mean) * lax.rsqrt(var + LN_EPS) * w + b
    return out.astype(x.dtype)


if __name__ == "__main__":
    batch, seq, hidden = 2, 8, 32

    key = jax.random.PRNGKey(0)
    kx, ky, km = jax.random.split(key, 3)
    x = jax.random.normal(kx, (batch, seq, hidden), dtype=jnp.float32)
    y = jax.random.normal(ky, (batch, seq, hidden), dtype=jnp.float32)

    # Parameters matching the torch module (mask random so the gate path is exercised;
    # LayerNorm weight/bias at their defaults).
    mask = 0.3 * jax.random.normal(km, (hidden,), dtype=jnp.float32)
    ln_w = jnp.ones((hidden,), dtype=jnp.float32)
    ln_b = jnp.zeros((hidden,), dtype=jnp.float32)

    # trainable_add=True, f32 I/O (folded lane-dense path, H=32 -> g=4).
    out = jax.block_until_ready(add_norm(x, y, mask, ln_w, ln_b, trainable_add=True))
    ref = _reference(x, y, mask, ln_w, ln_b, True)
    assert out.shape == x.shape
    assert jnp.allclose(out, ref, atol=1e-5, rtol=1e-5), "mismatch (trainable_add=True)"

    # trainable_add=False (x + y exactly).
    out2 = jax.block_until_ready(add_norm(x, y, mask, ln_w, ln_b, trainable_add=False))
    ref2 = _reference(x, y, mask, ln_w, ln_b, False)
    assert jnp.allclose(out2, ref2, atol=1e-5, rtol=1e-5), "mismatch (trainable_add=False)"

    # bf16 I/O: native-dtype loads/stores, f32 statistics in-kernel.
    xb, yb = x.astype(jnp.bfloat16), y.astype(jnp.bfloat16)
    outb = jax.block_until_ready(add_norm(xb, yb, mask, ln_w, ln_b, trainable_add=True))
    refb = _reference(xb, yb, mask, ln_w, ln_b, True)
    assert outb.dtype == jnp.bfloat16
    assert jnp.allclose(outb.astype(jnp.float32), refb.astype(jnp.float32),
                        atol=3e-2, rtol=3e-2), "mismatch (bf16)"

    # H multiple of 128 -> already lane-dense rowwise path.
    h2 = 256
    x3 = jax.random.normal(kx, (4, 8, h2), dtype=jnp.float32)
    y3 = jax.random.normal(ky, (4, 8, h2), dtype=jnp.float32)
    m3 = 0.1 * jax.random.normal(km, (h2,), dtype=jnp.float32)
    w3 = jnp.ones((h2,), jnp.float32)
    b3 = jnp.zeros((h2,), jnp.float32)
    out3 = jax.block_until_ready(add_norm(x3, y3, m3, w3, b3, trainable_add=True))
    ref3 = _reference(x3, y3, m3, w3, b3, True)
    assert jnp.allclose(out3, ref3, atol=1e-5, rtol=1e-5), "mismatch (H=256 rowwise)"

    print("KERNEL_OK")
</pallas_src>

<mosaic_0001>
module attributes {stable_mosaic.version = 11 : i64} {
  func.func @_addnorm_folded_kernel(%arg0: i32, %arg1: memref<8x128xf32, #tpu.memory_space<vmem>>, %arg2: memref<8x128xf32, #tpu.memory_space<vmem>>, %arg3: memref<8x128xf32, #tpu.memory_space<vmem>>, %arg4: memref<128x128xbf16, #tpu.memory_space<vmem>>, %arg5: memref<8x128xf32, #tpu.memory_space<vmem>>) attributes {dimension_semantics = [#tpu.dimension_semantics<parallel>], iteration_bounds = array<i64: 1>, scalar_prefetch = 0 : i64, scratch_operands = 0 : i64, tpu.core_type = #tpu.core_type<tc>, window_params = [{transform_indices = @transform_0, window_bounds = array<i64: 8, 128>}, {transform_indices = @transform_1, window_bounds = array<i64: 8, 128>}, {pipeline_mode = #tpu.pipeline_mode<synchronous>, transform_indices = @transform_2, window_bounds = array<i64: 8, 128>}, {pipeline_mode = #tpu.pipeline_mode<synchronous>, transform_indices = @transform_3, window_bounds = array<i64: 128, 128>}, {transform_indices = @transform_4, window_bounds = array<i64: 8, 128>}]} {
    %c0 = arith.constant 0 : index
    %c0_0 = arith.constant 0 : index
    %0 = vector.load %arg3[%c0, %c0_0] : memref<8x128xf32, #tpu.memory_space<vmem>>, vector<8x128xf32>
    %1 = vector.extract_strided_slice %0 {offsets = [0, 0], sizes = [1, 128], strides = [1, 1]} : vector<8x128xf32> to vector<1x128xf32>
    %2 = vector.extract_strided_slice %0 {offsets = [1, 0], sizes = [1, 128], strides = [1, 1]} : vector<8x128xf32> to vector<1x128xf32>
    %3 = vector.extract_strided_slice %0 {offsets = [2, 0], sizes = [1, 128], strides = [1, 1]} : vector<8x128xf32> to vector<1x128xf32>
    %c0_1 = arith.constant 0 : index
    %c0_2 = arith.constant 0 : index
    %4 = vector.load %arg4[%c0_1, %c0_2] : memref<128x128xbf16, #tpu.memory_space<vmem>>, vector<128x128xbf16>
    %c0_3 = arith.constant 0 : index
    %c0_4 = arith.constant 0 : index
    %5 = vector.load %arg1[%c0_3, %c0_4] : memref<8x128xf32, #tpu.memory_space<vmem>>, vector<8x128xf32>
    %c0_5 = arith.constant 0 : index
    %c0_6 = arith.constant 0 : index
    %6 = vector.load %arg2[%c0_5, %c0_6] : memref<8x128xf32, #tpu.memory_space<vmem>>, vector<8x128xf32>
    %7 = vector.broadcast %1 : vector<1x128xf32> to vector<8x128xf32>
    %8 = arith.mulf %6, %7 : vector<8x128xf32>
    %9 = arith.addf %5, %8 : vector<8x128xf32>
    %10 = arith.truncf %9 : vector<8x128xf32> to vector<8x128xbf16>
    %11 = arith.extf %10 : vector<8x128xbf16> to vector<8x128xf32>
    %12 = arith.subf %9, %11 : vector<8x128xf32>
    %13 = arith.truncf %12 : vector<8x128xf32> to vector<8x128xbf16>
    %cst = arith.constant dense<0.000000e+00> : vector<8x128xf32>
    %14 = tpu.matmul %10, %4, %cst {dimension_numbers = #tpu.dot_dimension_numbers<[1], [0], [0], [1], [0, 0, 1, 1], [], []>} : vector<8x128xbf16>, vector<128x128xbf16>, vector<8x128xf32> -> vector<8x128xf32>
    %cst_7 = arith.constant dense<0.000000e+00> : vector<8x128xf32>
    %15 = tpu.matmul %13, %4, %cst_7 {dimension_numbers = #tpu.dot_dimension_numbers<[1], [0], [0], [1], [0, 0, 1, 1], [], []>} : vector<8x128xbf16>, vector<128x128xbf16>, vector<8x128xf32> -> vector<8x128xf32>
    %16 = arith.addf %14, %15 : vector<8x128xf32>
    %cst_8 = arith.constant 3.125000e-02 : f32
    %17 = vector.broadcast %cst_8 : f32 to vector<8x128xf32>
    %18 = arith.mulf %16, %17 : vector<8x128xf32>
    %19 = arith.subf %9, %18 : vector<8x128xf32>
    %20 = arith.mulf %19, %19 : vector<8x128xf32>
    %21 = arith.truncf %20 : vector<8x128xf32> to vector<8x128xbf16>
    %22 = arith.extf %21 : vector<8x128xbf16> to vector<8x128xf32>
    %23 = arith.subf %20, %22 : vector<8x128xf32>
    %24 = arith.truncf %23 : vector<8x128xf32> to vector<8x128xbf16>
    %cst_9 = arith.constant dense<0.000000e+00> : vector<8x128xf32>
    %25 = tpu.matmul %21, %4, %cst_9 {dimension_numbers = #tpu.dot_dimension_numbers<[1], [0], [0], [1], [0, 0, 1, 1], [], []>} : vector<8x128xbf16>, vector<128x128xbf16>, vector<8x128xf32> -> vector<8x128xf32>
    %cst_10 = arith.constant dense<0.000000e+00> : vector<8x128xf32>
    %26 = tpu.matmul %24, %4, %cst_10 {dimension_numbers = #tpu.dot_dimension_numbers<[1], [0], [0], [1], [0, 0, 1, 1], [], []>} : vector<8x128xbf16>, vector<128x128xbf16>, vector<8x128xf32> -> vector<8x128xf32>
    %27 = arith.addf %25, %26 : vector<8x128xf32>
    %cst_11 = arith.constant 3.125000e-02 : f32
    %28 = vector.broadcast %cst_11 : f32 to vector<8x128xf32>
    %29 = arith.mulf %27, %28 : vector<8x128xf32>
    %cst_12 = arith.constant 9.99999974E-6 : f32
    %30 = vector.broadcast %cst_12 : f32 to vector<8x128xf32>
    %31 = arith.addf %29, %30 : vector<8x128xf32>
    %32 = math.rsqrt %31 : vector<8x128xf32>
    %33 = arith.mulf %19, %32 : vector<8x128xf32>
    %34 = vector.broadcast %2 : vector<1x128xf32> to vector<8x128xf32>
    %35 = arith.mulf %33, %34 : vector<8x128xf32>
    %36 = vector.broadcast %3 : vector<1x128xf32> to vector<8x128xf32>
    %37 = arith.addf %35, %36 : vector<8x128xf32>
    %c0_13 = arith.constant 0 : index
    %c0_14 = arith.constant 0 : index
    %38 = vector.load %arg5[%c0_13, %c0_14] : memref<8x128xf32, #tpu.memory_space<vmem>>, vector<8x128xf32>
    tpu.vector_store %arg5[%c0_13, %c0_14], %37 {strides = array<i32>} : memref<8x128xf32, #tpu.memory_space<vmem>>, vector<8x128xf32>,
    return
  }
  func.func @transform_0(%arg0: i32) -> (i32, i32) {
    %c0_i32 = arith.constant 0 : i32
    %c0_i32_0 = arith.constant 0 : i32
    return %arg0, %c0_i32 : i32, i32
  }
  func.func @transform_1(%arg0: i32) -> (i32, i32) {
    %c0_i32 = arith.constant 0 : i32
    %c0_i32_0 = arith.constant 0 : i32
    return %arg0, %c0_i32 : i32, i32
  }
  func.func @transform_2(%arg0: i32) -> (i32, i32) {
    %c0_i32 = arith.constant 0 : i32
    %c0_i32_0 = arith.constant 0 : i32
    %c0_i32_1 = arith.constant 0 : i32
    return %c0_i32, %c0_i32_0 : i32, i32
  }
  func.func @transform_3(%arg0: i32) -> (i32, i32) {
    %c0_i32 = arith.constant 0 : i32
    %c0_i32_0 = arith.constant 0 : i32
    %c0_i32_1 = arith.constant 0 : i32
    return %c0_i32, %c0_i32_0 : i32, i32
  }
  func.func @transform_4(%arg0: i32) -> (i32, i32) {
    %c0_i32 = arith.constant 0 : i32
    %c0_i32_0 = arith.constant 0 : i32
    return %arg0, %c0_i32 : i32, i32
  }
}

</mosaic_0001>

<llo_original>
// kernel: tile.18
$region0: #{tile.18}
  #allocation0 [shape = 's32[1]{0}', space=sflag, size = 0x4, scoped, tag = 'scoped memory for tile.18']
  %s0 = inlined_call_operand.vmem [shape: f32[32], index: 0, kind: input, shape index: {}]
  %s1 = inlined_call_operand.vmem [shape: f32[4,32], index: 1, kind: output, shape index: {}]
  // Predicated region
  $region2: #{tile.18} parent=0 // pred_check
    _
  $region3: #{tile.18} parent=0 // pred_check_branch
    %3 = sbr.rel (0) target = $region5
  $region4: #{tile.18} parent=0 // pred_region
    _
  $region5: #{tile.18} parent=0 // pred_fallthru
    _
  %v4 = vld [vmem:[%s0] ss:$0 sm:$0xff]
  %5 = vst [vmem:[%s1] sm:$0xf] %v4

</llo_original>
